<compile_context>
chip_gen: v5e
topology: v5e:2x2
jax: 0.10.0
libtpu: 0.0.40
codegen_flags: <defaults>
</compile_context>

<pallas_src>
import math

import jax
import jax.numpy as jnp
from jax.experimental import pallas as pl
from jax.experimental.pallas import tpu as pltpu

LANES = 128
BLOCK_BYTES_TARGET = 4 * 1024 * 1024      # ~4 MiB per block, per array
VMEM_LIMIT_CAP = 32 * 1024 * 1024         # safe on v5e/v6e/v7x

_SQRT2 = 1.4142135623730951
_QUARTER_PI = 0.7853981633974483


def _round_up(v: int, m: int) -> int:
    return ((v + m - 1) // m) * m


def _round_down(v: int, m: int) -> int:
    return (v // m) * m


def _sublanes(dtype) -> int:
    # Native packed tile rows: 8 (4-byte), 16 (2-byte), 32 (1-byte).
    return max(8, 32 // jnp.dtype(dtype).itemsize)


def _cores_per_device() -> int:
    """Best-effort TensorCore count per device (v7x: 2, v5e/v6e: 1)."""
    try:
        info = pltpu.get_tpu_info()
        for attr in ("num_cores", "core_count", "num_tensorcores"):
            v = getattr(info, attr, None)
            if isinstance(v, int) and v > 0:
                return v
    except Exception:
        pass
    try:
        v = getattr(jax.devices()[0], "num_cores", None)
        if isinstance(v, int) and v > 0:
            return v
    except Exception:
        pass
    return 1


def _wave_kernel(x_ref, o_ref):
    # cos(x) + sin(x) == sqrt(2) * sin(x + pi/4): single EUP push per element.
    x = x_ref[...].astype(jnp.float32)
    o_ref[...] = (_SQRT2 * jnp.sin(x + _QUARTER_PI)).astype(o_ref.dtype)


def _wave_slab(slab: jax.Array, out_dtype) -> jax.Array:
    """Run the kernel over a (rows, 128) slab."""
    rows = slab.shape[0]
    in_isz = jnp.dtype(slab.dtype).itemsize
    out_isz = jnp.dtype(out_dtype).itemsize
    sub = max(_sublanes(slab.dtype), _sublanes(out_dtype))

    # Largest row tile whose bigger (in or out) buffer is ~BLOCK_BYTES_TARGET.
    max_rows = max(
        sub, _round_down(BLOCK_BYTES_TARGET // (LANES * max(in_isz, out_isz)), sub)
    )

    cores = _cores_per_device()
    if cores > 1 and rows > 2 * sub:
        # >=2 grid steps per TensorCore so each core double-buffers its DMAs.
        min_steps = 2 * cores
        row_tile = min(max_rows, max(sub, _round_up(pl.cdiv(rows, min_steps), sub)))
    else:
        # Single-TC chip: largest tile that fits; never shrink just to split.
        row_tile = min(max_rows, _round_up(rows, sub))

    grid = (pl.cdiv(rows, row_tile),)

    block_bytes = row_tile * LANES * (in_isz + out_isz)
    vmem_limit = int(min(VMEM_LIMIT_CAP, max(16 << 20, 2 * block_bytes + (4 << 20))))

    return pl.pallas_call(
        _wave_kernel,
        out_shape=jax.ShapeDtypeStruct(slab.shape, out_dtype),
        grid_spec=pltpu.PrefetchScalarGridSpec(
            num_scalar_prefetch=0,
            grid=grid,
            in_specs=[pl.BlockSpec((row_tile, LANES), lambda i: (i, 0))],
            out_specs=pl.BlockSpec((row_tile, LANES), lambda i: (i, 0)),
        ),
        compiler_params=pltpu.CompilerParams(
            dimension_semantics=("parallel",),
            vmem_limit_bytes=vmem_limit,
        ),
    )(slab)


def wave(x: jax.Array) -> jax.Array:
    """cos(x) + sin(x), computed with a Pallas TPU kernel."""
    orig_shape = x.shape
    # PyTorch promotes integer/bool inputs to float for cos/sin.
    out_dtype = x.dtype if jnp.issubdtype(x.dtype, jnp.floating) else jnp.float32

    n = math.prod(orig_shape) if orig_shape else 1
    if n == 0:
        return jnp.zeros(orig_shape, out_dtype)

    flat = x.reshape(-1)
    n_body = (n // LANES) * LANES

    if n_body == n:
        # Common case: zero-copy reshapes, no pad / slice HBM passes.
        return _wave_slab(flat.reshape(-1, LANES), out_dtype).reshape(orig_shape)

    if n_body == 0:
        # Tiny (<128 elements): not worth a kernel launch.
        xf = flat.astype(jnp.float32)
        return (jnp.cos(xf) + jnp.sin(xf)).astype(out_dtype).reshape(orig_shape)

    # Misaligned tail (<128 elements): kernel on the aligned body, plain JAX on
    # the tail — avoids re-copying the whole array via pad + slice.
    body = _wave_slab(flat[:n_body].reshape(-1, LANES), out_dtype).reshape(-1)
    tf = flat[n_body:].astype(jnp.float32)
    tail = (jnp.cos(tf) + jnp.sin(tf)).astype(out_dtype)
    return jnp.concatenate([body, tail]).reshape(orig_shape)


if __name__ == "__main__":
    key = jax.random.PRNGKey(0)
    # Small NCHW input consistent with a conv-style activation usage.
    x = jax.random.normal(key, (2, 4, 16, 16), dtype=jnp.float32)

    y = wave(x)
    jax.block_until_ready(y)

    # Reference check in plain JAX (module semantics: cos(x) + sin(x)).
    y_ref = jnp.cos(x) + jnp.sin(x)
    assert y.shape == x.shape and y.dtype == x.dtype
    assert jnp.allclose(y, y_ref, atol=1e-5, rtol=1e-5)

    print("KERNEL_OK")
</pallas_src>

<mosaic_0001>
module attributes {stable_mosaic.version = 11 : i64} {
  func.func @_wave_kernel(%arg0: i32, %arg1: memref<16x128xf32, #tpu.memory_space<vmem>>, %arg2: memref<16x128xf32, #tpu.memory_space<vmem>>) attributes {dimension_semantics = [#tpu.dimension_semantics<parallel>], iteration_bounds = array<i64: 1>, scalar_prefetch = 0 : i64, scratch_operands = 0 : i64, tpu.core_type = #tpu.core_type<tc>, window_params = [{transform_indices = @transform_0, window_bounds = array<i64: 16, 128>}, {transform_indices = @transform_1, window_bounds = array<i64: 16, 128>}]} {
    %c0 = arith.constant 0 : index
    %c0_0 = arith.constant 0 : index
    %0 = vector.load %arg1[%c0, %c0_0] : memref<16x128xf32, #tpu.memory_space<vmem>>, vector<16x128xf32>
    %cst = arith.constant 0.785398185 : f32
    %1 = vector.broadcast %cst : f32 to vector<16x128xf32>
    %2 = arith.addf %0, %1 : vector<16x128xf32>
    %3 = math.sin %2 : vector<16x128xf32>
    %cst_1 = arith.constant 1.41421354 : f32
    %4 = vector.broadcast %cst_1 : f32 to vector<16x128xf32>
    %5 = arith.mulf %4, %3 : vector<16x128xf32>
    %c0_2 = arith.constant 0 : index
    %c0_3 = arith.constant 0 : index
    %6 = vector.load %arg2[%c0_2, %c0_3] : memref<16x128xf32, #tpu.memory_space<vmem>>, vector<16x128xf32>
    tpu.vector_store %arg2[%c0_2, %c0_3], %5 {strides = array<i32>} : memref<16x128xf32, #tpu.memory_space<vmem>>, vector<16x128xf32>,
    return
  }
  func.func @transform_0(%arg0: i32) -> (i32, i32) {
    %c0_i32 = arith.constant 0 : i32
    %c0_i32_0 = arith.constant 0 : i32
    return %arg0, %c0_i32 : i32, i32
  }
  func.func @transform_1(%arg0: i32) -> (i32, i32) {
    %c0_i32 = arith.constant 0 : i32
    %c0_i32_0 = arith.constant 0 : i32
    return %arg0, %c0_i32 : i32, i32
  }
}

</mosaic_0001>

<llo_original>
// kernel: tpu_custom_call.1
$region0: #{tpu_custom_call.1}
  #allocation0 [shape = 'u32[]', space=smem, size = 0x4, offset = 0x4, fixed_abs, tag = 'smem constant byte address 0x4 - core index']
  #allocation1 [shape = 'u32[72,128]{1,0:T(1,128)}', space=vmem, size = 0x9000, scoped, tag = 'internal scratch']
  %s0 = inlined_call_operand.hbm [shape: f32[16,128], index: 0, kind: input, shape index: {}]
  %s1 = inlined_call_operand.hbm [shape: f32[16,128], index: 1, kind: output, shape index: {}]
  %s2 = sld [smem:[#allocation0]]
  $region18: #{tpu_custom_call.1} parent=0
    _
  %s4 = ssub.s32 1, %s2
  %s5 = scalar_select 0, %s4, %s2
  $region1: #{tpu_custom_call.1} parent=0
    #allocation2 [shape = 'u8[8192]{0}', space=vmem, size = 0x2000, scoped, tag = 'input window, operand 0, single buffered']
    #allocation3 [shape = 's32[1]{0}', space=sflag, size = 0x4, scoped, tag = 'scoped memory for tpu_custom_call.1']
    #allocation4 [shape = 's32[1]{0}', space=sflag, size = 0x4, scoped, tag = 'scoped memory for tpu_custom_call.1']
    #allocation5 [shape = 'u8[8192]{0}', space=vmem, size = 0x2000, scoped, tag = 'output window, operand 0, single buffered']
    %6 = vsyncpa [#allocation3], 0
    %7 = vsyncpa [#allocation4], 0
    // Predicated region
    $region2: #{tpu_custom_call.1} parent=1 // pred_check
      _
    $region3: #{tpu_custom_call.1} parent=1 // pred_check_branch
      %9 = sbr.rel (0) target = $region5
    $region4: #{tpu_custom_call.1} parent=1 // pred_region
      %11 = vsyncadd [#allocation3], 0
      %s12 = sshll.u32 %s0, 4
      %s13 = int_to_ptr.hbm [resolvable:$true] %s12
      %s14 = sshll.u32 [#allocation2], 4
      %s15 = int_to_ptr.vmem [resolvable:$true] %s14
      %20 = dma.hbm_to_vmem [thread:$0]  %s13, 256, %s15, [#allocation3], 128, 128, 8
    $region5: #{tpu_custom_call.1} parent=1 // pred_fallthru
      _
    // Predicated region
    $region6: #{tpu_custom_call.1} parent=1 // pred_check
      _
    $region7: #{tpu_custom_call.1} parent=1 // pred_check_branch
      %22 = sbr.rel (0) target = $region9
    $region8: #{tpu_custom_call.1} parent=1 // pred_region
      %24 = dma.done [#allocation3], 256
    $region9: #{tpu_custom_call.1} parent=1 // pred_fallthru
      _
    %v25 = vld [vmem:[#allocation2] sm:$0xff]
    %v26 = vld [vmem:[#allocation2 + $0x8] sm:$0xff]
    %v27 = vadd.f32 %v25, 0.7853982
    %v28 = vadd.f32 %v26, 0.7853982
    %v29 = vand.u32 2147483647, %v27
    %vm30 = vcmp.le.f32.partialorder %v29, 0.7853982
    %vm31 = vcmp.lt.s32.totalorder %v27, 0
    %v32 = vand.u32 %v27, 2139095040
    %v33 = vshrl.u32 %v32, 23
    %v34 = vsub.s32 %v33, 127
    %v35 = vand.u32 2147483647, %v27
    %v36 = vand.u32 %v35, 8388607
    %v37 = vor.u32 %v36, 8388608
    %v38 = vsub.s32 0, %v37
    %v39 = vadd.s32 %v34, 1
    %vm40 = vcmp.gt.s32.totalorder %v39, 0
    %v41 = vsel %vm40, %v39, 0
    %v42 = vshrl.u32 %v41, 5
    %v43 = vand.u32 %v41, 31
    %v44 = vsub.s32 32, %v43
    %v45 = vshrl.u32 683565275, %v44
    %v46 = vshll.u32 683565275, %v43
    %v47 = vshrl.u32 2475754826, %v44
    %v48 = vor.u32 %v46, %v47
    %v49 = vshll.u32 2475754826, %v43
    %v50 = vshrl.u32 2131351028, %v44
    %v51 = vor.u32 %v49, %v50
    %v52 = vshll.u32 2131351028, %v43
    %v53 = vshrl.u32 2102212464, %v44
    %v54 = vor.u32 %v52, %v53
    %v55 = vshll.u32 2102212464, %v43
    %v56 = vshrl.u32 920167782, %v44
    %v57 = vor.u32 %v55, %v56
    %v58 = vshll.u32 920167782, %v43
    %v59 = vshrl.u32 1326507024, %v44
    %v60 = vor.u32 %v58, %v59
    %vm61 = vcmp.lt.s32.totalorder %v42, 1
    %vm62 = vcmp.lt.s32.totalorder %v42, 2
    %vm63 = vcmp.lt.s32.totalorder %v42, 3
    %vm64 = vcmp.lt.s32.totalorder %v42, 4
    %v65 = vsel %vm61, %v45, %v48
    %v66 = vsel %vm64, %v54, 2102212464
    %v67 = vsel %vm63, %v51, %v66
    %v68 = vsel %vm62, %v65, %v67
    %v69 = vsel %vm61, %v48, %v51
    %v70 = vsel %vm64, %v57, 920167782
    %v71 = vsel %vm63, %v54, %v70
    %v72 = vsel %vm62, %v69, %v71
    %v73 = vsel %vm61, %v51, %v54
    %v74 = vsel %vm64, %v60, 1326507024
    %v75 = vsel %vm63, %v57, %v74
    %v76 = vsel %vm62, %v73, %v75
    %v77 = vshll.u32 %v37, 8
    %v78 = vand.u32 %v77, 65535
    %v79 = vshrl.u32 %v77, 16
    %v80 = vand.u32 %v76, 65535
    %v81 = vshrl.u32 %v76, 16
    %v82 = vmul.u32 %v78, %v80
    %v83 = vmul.u32 %v78, %v81
    %v84 = vmul.u32 %v79, %v80
    %v85 = vmul.u32 %v79, %v81
    %v86 = vshll.u32 %v83, 16
    %v87 = vshrl.u32 %v83, 16
    %v88 = vshll.u32 %v84, 16
    %v89 = vshrl.u32 %v84, 16
    %vm90 = vc.u32 %v82, %v86
    %v91 = vsel %vm90, 1, 0
    %v92 = vadd.s32 %v82, %v86
    %v93 = vadd.s32 %v85, %v91
    %vm94 = vc.u32 %v92, %v88
    %v95 = vsel %vm94, 1, 0
    %v96 = vadd.s32 %v92, %v88
    %v97 = vadd.s32 %v93, %v95
    %v98 = vadd.s32 %v97, %v87
    %v99 = vadd.s32 %v98, %v89
    %v100 = vand.u32 %v77, 65535
    %v101 = vshrl.u32 %v77, 16
    %v102 = vand.u32 %v72, 65535
    %v103 = vshrl.u32 %v72, 16
    %v104 = vmul.u32 %v100, %v102
    %v105 = vmul.u32 %v100, %v103
    %v106 = vmul.u32 %v101, %v102
    %v107 = vmul.u32 %v101, %v103
    %v108 = vshll.u32 %v105, 16
    %v109 = vshrl.u32 %v105, 16
    %v110 = vshll.u32 %v106, 16
    %v111 = vshrl.u32 %v106, 16
    %vm112 = vc.u32 %v104, %v108
    %v113 = vsel %vm112, 1, 0
    %v114 = vadd.s32 %v104, %v108
    %v115 = vadd.s32 %v107, %v113
    %vm116 = vc.u32 %v114, %v110
    %v117 = vsel %vm116, 1, 0
    %v118 = vadd.s32 %v114, %v110
    %v119 = vadd.s32 %v115, %v117
    %v120 = vadd.s32 %v119, %v109
    %v121 = vadd.s32 %v120, %v111
    %v122 = vmul.u32 %v77, %v68
    %v123 = vadd.s32 %v99, %v118
    %vm124 = vc.u32 %v99, %v118
    %v125 = vadd.s32 %v121, 1
    %v126 = vsel %vm124, %v125, %v121
    %v127 = vadd.s32 %v122, %v126
    %v128 = vadd.s32 %v127, 536870912
    %v129 = vshrl.u32 %v128, 30
    %v130 = vshll.u32 %v129, 30
    %v131 = vsub.s32 %v127, %v130
    %vm132 = vcmp.lt.s32.totalorder %v131, 0
    %v133 = vsub.s32 0, %v131
    %v134 = vsel %vm132, %v133, %v131
    %v135 = vclz %v134
    %v136 = vsub.s32 %v135, 2
    %vm137 = vcmp.gt.s32.totalorder 0, %v136
    %v138 = vsel %vm137, 0, %v136
    %v139 = vsub.s32 32, %v138
    %v140 = vshll.u32 %v131, %v138
    %v141 = vshrl.u32 %v123, %v139
    %v142 = vor.u32 %v140, %v141
    %v143 = vsub.s32 4294967266, %v138
    %v144 = vadd.s32 %v143, 127
    %v145 = vshll.u32 %v144, 23
    %v146 = vor.u32 4788187, %v145
    %v147 = vand.u32 2147483647, %v146
    %v149 = vcvt.s32.f32 %v142
    %v150 = vmul.f32 %v149, %v147
    %v151 = vxor.u32 %v150, 2147483648
    %v152 = vsel %vm31, %v151, %v150
    %v153 = vsub.s32 4, %v129
    %v154 = vsel %vm31, %v153, %v129
    %v155 = vsel %vm30, %v27, %v152
    %v156 = vsel %vm30, 0, %v154
    %v157 = vmul.f32 %v155, %v155
    %v158 = vmul.f32 %v157, -0.001358992
    %v159 = vadd.f32 %v158, 0.041655596
    %v160 = vmul.f32 %v157, %v159
    %v161 = vadd.f32 %v160, -0.4999988
    %v162 = vmul.f32 %v157, %v161
    %v163 = vadd.f32 1.0, %v162
    %v164 = vmul.f32 %v155, %v155
    %v165 = vmul.f32 %v164, -0.00019511016
    %v166 = vadd.f32 %v165, 0.008332121
    %v167 = vmul.f32 %v164, %v166
    %v168 = vadd.f32 %v167, -0.16666654
    %v169 = vmul.f32 %v164, %v168
    %v170 = vadd.f32 %v169, 1.0
    %v171 = vmul.f32 %v170, %v155
    %vm172 = vweird.f32 %v27
    %v173 = vadd.s32 %v156, 3
    %v174 = vand.u32 %v173, 3
    %vm175 = vcmp.lt.s32.totalorder %v174, 2
    %vm176 = vcmp.eq.s32.totalorder %v174, 0
    %v177 = vxor.u32 %v171, 2147483648
    %v178 = vsel %vm176, %v163, %v177
    %vm179 = vcmp.eq.s32.totalorder %v174, 2
    %v180 = vxor.u32 %v163, 2147483648
    %v181 = vsel %vm179, %v180, %v171
    %v182 = vsel %vm175, %v178, %v181
    %v183 = vsel %vm172, nan, %v182
    %v184 = vand.u32 2147483647, %v28
    %vm185 = vcmp.le.f32.partialorder %v184, 0.7853982
    %vm186 = vcmp.lt.s32.totalorder %v28, 0
    %v187 = vand.u32 %v28, 2139095040
    %v188 = vshrl.u32 %v187, 23
    %v189 = vsub.s32 %v188, 127
    %v190 = vand.u32 2147483647, %v28
    %v191 = vand.u32 %v190, 8388607
    %v192 = vor.u32 %v191, 8388608
    %v193 = vsub.s32 0, %v192
    %v194 = vadd.s32 %v189, 1
    %vm195 = vcmp.gt.s32.totalorder %v194, 0
    %v196 = vsel %vm195, %v194, 0
    %v197 = vshrl.u32 %v196, 5
    %v198 = vand.u32 %v196, 31
    %v199 = vsub.s32 32, %v198
    %v200 = vshrl.u32 683565275, %v199
    %v201 = vshll.u32 683565275, %v198
    %v202 = vshrl.u32 2475754826, %v199
    %v203 = vor.u32 %v201, %v202
    %v204 = vshll.u32 2475754826, %v198
    %v205 = vshrl.u32 2131351028, %v199
    %v206 = vor.u32 %v204, %v205
    %v207 = vshll.u32 2131351028, %v198
    %v208 = vshrl.u32 2102212464, %v199
    %v209 = vor.u32 %v207, %v208
    %v210 = vshll.u32 2102212464, %v198
    %v211 = vshrl.u32 920167782, %v199
    %v212 = vor.u32 %v210, %v211
    %v213 = vshll.u32 920167782, %v198
    %v214 = vshrl.u32 1326507024, %v199
    %v215 = vor.u32 %v213, %v214
    %vm216 = vcmp.lt.s32.totalorder %v197, 1
    %vm217 = vcmp.lt.s32.totalorder %v197, 2
    %vm218 = vcmp.lt.s32.totalorder %v197, 3
    %vm219 = vcmp.lt.s32.totalorder %v197, 4
    %v220 = vsel %vm216, %v200, %v203
    %v221 = vsel %vm219, %v209, 2102212464
    %v222 = vsel %vm218, %v206, %v221
    %v223 = vsel %vm217, %v220, %v222
    %v224 = vsel %vm216, %v203, %v206
    %v225 = vsel %vm219, %v212, 920167782
    %v226 = vsel %vm218, %v209, %v225
    %v227 = vsel %vm217, %v224, %v226
    %v228 = vsel %vm216, %v206, %v209
    %v229 = vsel %vm219, %v215, 1326507024
    %v230 = vsel %vm218, %v212, %v229
    %v231 = vsel %vm217, %v228, %v230
    %v232 = vshll.u32 %v192, 8
    %v233 = vand.u32 %v232, 65535
    %v234 = vshrl.u32 %v232, 16
    %v235 = vand.u32 %v231, 65535
    %v236 = vshrl.u32 %v231, 16
    %v237 = vmul.u32 %v233, %v235
    %v238 = vmul.u32 %v233, %v236
    %v239 = vmul.u32 %v234, %v235
    %v240 = vmul.u32 %v234, %v236
    %v241 = vshll.u32 %v238, 16
    %v242 = vshrl.u32 %v238, 16
    %v243 = vshll.u32 %v239, 16
    %v244 = vshrl.u32 %v239, 16
    %vm245 = vc.u32 %v237, %v241
    %v246 = vsel %vm245, 1, 0
    %v247 = vadd.s32 %v237, %v241
    %v248 = vadd.s32 %v240, %v246
    %vm249 = vc.u32 %v247, %v243
    %v250 = vsel %vm249, 1, 0
    %v251 = vadd.s32 %v247, %v243
    %v252 = vadd.s32 %v248, %v250
    %v253 = vadd.s32 %v252, %v242
    %v254 = vadd.s32 %v253, %v244
    %v255 = vand.u32 %v232, 65535
    %v256 = vshrl.u32 %v232, 16
    %v257 = vand.u32 %v227, 65535
    %v258 = vshrl.u32 %v227, 16
    %v259 = vmul.u32 %v255, %v257
    %v260 = vmul.u32 %v255, %v258
    %v261 = vmul.u32 %v256, %v257
    %v262 = vmul.u32 %v256, %v258
    %v263 = vshll.u32 %v260, 16
    %v264 = vshrl.u32 %v260, 16
    %v265 = vshll.u32 %v261, 16
    %v266 = vshrl.u32 %v261, 16
    %vm267 = vc.u32 %v259, %v263
    %v268 = vsel %vm267, 1, 0
    %v269 = vadd.s32 %v259, %v263
    %v270 = vadd.s32 %v262, %v268
    %vm271 = vc.u32 %v269, %v265
    %v272 = vsel %vm271, 1, 0
    %v273 = vadd.s32 %v269, %v265
    %v274 = vadd.s32 %v270, %v272
    %v275 = vadd.s32 %v274, %v264
    %v276 = vadd.s32 %v275, %v266
    %v277 = vmul.u32 %v232, %v223
    %v278 = vadd.s32 %v254, %v273
    %vm279 = vc.u32 %v254, %v273
    %v280 = vadd.s32 %v276, 1
    %v281 = vsel %vm279, %v280, %v276
    %v282 = vadd.s32 %v277, %v281
    %v283 = vadd.s32 %v282, 536870912
    %v284 = vshrl.u32 %v283, 30
    %v285 = vshll.u32 %v284, 30
    %v286 = vsub.s32 %v282, %v285
    %vm287 = vcmp.lt.s32.totalorder %v286, 0
    %v288 = vsub.s32 0, %v286
    %v289 = vsel %vm287, %v288, %v286
    %v290 = vclz %v289
    %v291 = vsub.s32 %v290, 2
    %vm292 = vcmp.gt.s32.totalorder 0, %v291
    %v293 = vsel %vm292, 0, %v291
    %v294 = vsub.s32 32, %v293
    %v295 = vshll.u32 %v286, %v293
    %v296 = vshrl.u32 %v278, %v294
    %v297 = vor.u32 %v295, %v296
    %v298 = vsub.s32 4294967266, %v293
    %v299 = vadd.s32 %v298, 127
    %v300 = vshll.u32 %v299, 23
    %v301 = vor.u32 4788187, %v300
    %v302 = vand.u32 2147483647, %v301
    %v304 = vcvt.s32.f32 %v297
    %v305 = vmul.f32 %v304, %v302
    %v306 = vxor.u32 %v305, 2147483648
    %v307 = vsel %vm186, %v306, %v305
    %v308 = vsub.s32 4, %v284
    %v309 = vsel %vm186, %v308, %v284
    %v310 = vsel %vm185, %v28, %v307
    %v311 = vsel %vm185, 0, %v309
    %v312 = vmul.f32 %v310, %v310
    %v313 = vmul.f32 %v312, -0.001358992
    %v314 = vadd.f32 %v313, 0.041655596
    %v315 = vmul.f32 %v312, %v314
    %v316 = vadd.f32 %v315, -0.4999988
    %v317 = vmul.f32 %v312, %v316
    %v318 = vadd.f32 1.0, %v317
    %v319 = vmul.f32 %v310, %v310
    %v320 = vmul.f32 %v319, -0.00019511016
    %v321 = vadd.f32 %v320, 0.008332121
    %v322 = vmul.f32 %v319, %v321
    %v323 = vadd.f32 %v322, -0.16666654
    %v324 = vmul.f32 %v319, %v323
    %v325 = vadd.f32 %v324, 1.0
    %v326 = vmul.f32 %v325, %v310
    %vm327 = vweird.f32 %v28
    %v328 = vadd.s32 %v311, 3
    %v329 = vand.u32 %v328, 3
    %vm330 = vcmp.lt.s32.totalorder %v329, 2
    %vm331 = vcmp.eq.s32.totalorder %v329, 0
    %v332 = vxor.u32 %v326, 2147483648
    %v333 = vsel %vm331, %v318, %v332
    %vm334 = vcmp.eq.s32.totalorder %v329, 2
    %v335 = vxor.u32 %v318, 2147483648
    %v336 = vsel %vm334, %v335, %v326
    %v337 = vsel %vm330, %v333, %v336
    %v338 = vsel %vm327, nan, %v337
    %v339 = vmul.f32 %v183, 1.4142135
    %v340 = vmul.f32 %v338, 1.4142135
    %341 = vst [vmem:[#allocation5] sm:$0xff] %v339
    %342 = vst [vmem:[#allocation5 + $0x8] sm:$0xff] %v340
    // Predicated region
    $region10: #{tpu_custom_call.1} parent=1 // pred_check
      _
    $region11: #{tpu_custom_call.1} parent=1 // pred_check_branch
      %344 = sbr.rel (0) target = $region13
    $region12: #{tpu_custom_call.1} parent=1 // pred_region
      %346 = vsyncadd [#allocation4], 0
      %s347 = sshll.u32 [#allocation5], 4
      %s348 = int_to_ptr.vmem [resolvable:$true] %s347
      %s349 = sshll.u32 %s1, 4
      %s350 = int_to_ptr.hbm [resolvable:$true] %s349
      %355 = dma.vmem_to_hbm [thread:$0]  %s348, 256, %s350, [#allocation4], 128, 128, 8
    $region13: #{tpu_custom_call.1} parent=1 // pred_fallthru
      _
    // Predicated region
    $region14: #{tpu_custom_call.1} parent=1 // pred_check
      _
    $region15: #{tpu_custom_call.1} parent=1 // pred_check_branch
      %357 = sbr.rel (0) target = $region17
    $region16: #{tpu_custom_call.1} parent=1 // pred_region
      %359 = dma.done [#allocation4], 256
    $region17: #{tpu_custom_call.1} parent=1 // pred_fallthru
      _
    %360 = vsyncpa [#allocation3], 1
    %361 = vsyncpa [#allocation4], 1

</llo_original>
